<compile_context>
chip_gen: v6e
topology: v6e:2x2x1
jax: 0.10.0
libtpu: 0.0.40
codegen_flags: <defaults>
</compile_context>

<pallas_src>
import jax
import jax.numpy as jnp
from jax import lax
from jax.experimental import pallas as pl
from jax.experimental.pallas import tpu as pltpu

F32 = jnp.float32
BF16 = jnp.bfloat16


def _round_up(x, m):
    return ((x + m - 1) // m) * m


def _pad2d(x, rows, cols):
    r, c = x.shape
    return jnp.pad(x, ((0, rows - r), (0, cols - c)))


def _l2_normalize(x, eps=1e-12):
    # F.normalize(x, dim=-1, p=2) == x / max(||x||_2, eps)
    #                             == x * rsqrt(max(||x||^2, eps^2))  (EUP rsqrt)
    sumsq = jnp.sum(x * x, axis=-1, keepdims=True)
    return x * lax.rsqrt(jnp.maximum(sumsq, eps * eps))


def _vmem_limit_bytes():
    # Generation-aware VMEM request with headroom for Mosaic internal scratch
    # and double-buffering: ~48 MiB on v7x (64 MiB physical), ~96 MiB on
    # v5e/v6e (128 MiB physical).
    cap = 128 * 1024 * 1024
    try:
        cap = int(getattr(pltpu.get_tpu_info(), "vmem_capacity_bytes", cap))
    except Exception:
        pass
    return int(min((cap * 3) // 4, 100 * 1024 * 1024))


# ---------------------------------------------------------------------------
# Kernel A: hop-1 mean aggregation (reduction-tiled) + encoder layer-1.
# Grid: (row tiles, reduction tiles over node columns).
# ---------------------------------------------------------------------------
def _hop1_kernel(a_ref, x_ref, w1_ref, h1_ref, acc_ref):
    k = pl.program_id(1)

    @pl.when(k == 0)
    def _():
        acc_ref[...] = jnp.zeros_like(acc_ref)

    # agg1: row-normalized (A + I) mean aggregation, accumulated over k tiles.
    acc_ref[...] += jnp.dot(a_ref[...], x_ref[...], preferred_element_type=F32)

    @pl.when(k == pl.num_programs(1) - 1)
    def _():
        # enc1 (gcn=True): relu(agg @ W1)
        h1 = jnp.maximum(
            jnp.dot(acc_ref[...].astype(BF16), w1_ref[...],
                    preferred_element_type=F32), 0.0)
        h1_ref[...] = h1.astype(h1_ref.dtype)


# ---------------------------------------------------------------------------
# Kernel B: hop-2 aggregation (reduction-tiled), fused mu|logvar heads,
# reparameterization, decoder, fused mapping1|mapping2, l2-normalized embs.
# Grid: (row tiles, reduction tiles).
# ---------------------------------------------------------------------------
def _make_encdec_kernel(std0, for_test, l2_pad, d2_pad):
    def kernel(*refs):
        if for_test:
            (a_ref, h1_ref, eps_ref, w2_ref, wd1_ref, bd1_ref, wd2_ref,
             bd2_ref, wm_ref, mu_ref, lvs_ref, e1_ref, e2_ref, acc_ref) = refs
        else:
            (a_ref, h1_ref, w2_ref, wd1_ref, bd1_ref, wd2_ref,
             bd2_ref, wm_ref, mu_ref, lvs_ref, e1_ref, e2_ref, acc_ref) = refs

        k = pl.program_id(1)

        @pl.when(k == 0)
        def _():
            acc_ref[...] = jnp.zeros_like(acc_ref)

        # agg2/agg3 share the same mean aggregation of the layer-1 embeddings.
        acc_ref[...] += jnp.dot(a_ref[...], h1_ref[...],
                                preferred_element_type=F32)

        @pl.when(k == pl.num_programs(1) - 1)
        def _():
            h1a_b = acc_ref[...].astype(BF16)
            # Fused mu|logvar heads: one 2*l2-lane matmul, split by lanes.
            heads = jnp.dot(h1a_b, w2_ref[...], preferred_element_type=F32)
            mu = heads[:, :l2_pad]
            logvar = heads[:, l2_pad:]
            mu_ref[...] = mu
            logvar_sub = -logvar
            lvs_ref[...] = logvar_sub

            # reparameterization: h = mu_q + int(for_test) * eps * std_q
            mu_q = _l2_normalize(mu)
            if for_test:
                std_q = jnp.exp(0.5 * logvar_sub) * std0
                h = mu_q + eps_ref[...] * std_q
            else:
                h = mu_q              # eps term multiplies int(False) == 0

            # decode(h)
            d1 = jnp.maximum(
                jnp.dot(h.astype(BF16), wd1_ref[...],
                        preferred_element_type=F32) + bd1_ref[...], 0.0)
            out = jnp.dot(d1.astype(BF16), wd2_ref[...],
                          preferred_element_type=F32) + bd2_ref[...]
            # Fused mapping1|mapping2: one 2*d2-lane matmul, split by lanes.
            embs = jnp.dot(out.astype(BF16), wm_ref[...],
                           preferred_element_type=F32)
            e1_ref[...] = _l2_normalize(embs[:, :d2_pad]).astype(e1_ref.dtype)
            e2_ref[...] = _l2_normalize(embs[:, d2_pad:]).astype(e2_ref.dtype)

    return kernel


# ---------------------------------------------------------------------------
# Kernel C: N x N inner-product reconstruction (bf16 output) and, in train
# mode, the discriminator reassociated to matvecs.  Grid: (row, col) tiles.
# ---------------------------------------------------------------------------
def _make_reconst_kernel(with_gan):
    def kernel(*refs):
        if with_gan:
            (e1_ref, e2_ref, adj_ref, u_ref, rec_ref, gan_ref,
             orig_acc, g_acc) = refs
        else:
            e1_ref, e2_ref, rec_ref = refs

        e1 = e1_ref[...]                              # (tm, d2) bf16
        e2 = e2_ref[...]                              # (tm, d2) bf16 (col tile)
        # reconst tile = emb1n @ emb2n.T (trans_b dot_general, no XLU transpose)
        rec = lax.dot_general(e1, e2, (((1,), (1,)), ((), ())),
                              preferred_element_type=F32)
        rec_ref[...] = rec.astype(rec_ref.dtype)      # bf16 writeback

        if with_gan:
            j = pl.program_id(1)

            @pl.when(j == 0)
            def _():
                orig_acc[...] = jnp.zeros_like(orig_acc)
                g_acc[...] = jnp.zeros_like(g_acc)

            u_b = u_ref[...]                          # (1, tm) bf16
            # orig_prob row tile = sum_j sub_adj[i, j] @ u[j]
            orig_acc[...] += lax.dot_general(u_b, adj_ref[...],
                                             (((1,), (1,)), ((), ())),
                                             preferred_element_type=F32)
            # g = emb2n^T @ u accumulated over column tiles
            g_acc[...] += lax.dot_general(u_b, e2, (((1,), (0,)), ((), ())),
                                          preferred_element_type=F32)

            @pl.when(j == pl.num_programs(1) - 1)
            def _():
                # gen_prob = reconst @ u == emb1n @ (emb2n^T @ u)
                gen = lax.dot_general(g_acc[...].astype(BF16), e1,
                                      (((1,), (1,)), ((), ())),
                                      preferred_element_type=F32)
                gan_ref[0:1, :] = orig_acc[...]
                gan_ref[1:2, :] = gen

    return kernel


def ggan_forward(x, a_norm, sub_adj, eps_noise, params, *, std0, for_test=False):
    """GGAN forward as three tiled Pallas calls.

    Returns (mu, logvar_sub, reconst_adj, gan_pred, gan_label); the GAN
    outputs are None when for_test=True, like the reference module.
    """
    N, F = x.shape
    L1 = params["w1"].shape[1]
    L2 = params["w2mu"].shape[1]
    D1 = params["wd1"].shape[1]
    D2 = params["wd2"].shape[1]

    # ---- node tiling: rows, reduction (kernels A/B) and columns (kernel C)
    # all use the same tile size so n_pad is a single multiple.
    n8 = _round_up(max(N, 8), 8)
    if n8 <= 128:
        tm = n8                       # single tile, block == full array
    elif n8 <= 4096:
        tm = 128                      # >=2 tiles: shards "parallel" axis
                                      # across v7x's two TensorCores
    else:
        tm = 256                      # better HBM roofline at large N
    n_pad = _round_up(n8, tm)
    n_tiles = n_pad // tm

    f_pad = _round_up(F, 128)
    l1_pad = _round_up(L1, 128)
    l2_pad = _round_up(L2, 128)
    d1_pad = _round_up(D1, 128)
    d2_pad = _round_up(D2, 128)

    # bf16 operands for every MXU matmul (f32 accumulation inside the kernels).
    xb = _pad2d(x, n_pad, f_pad).astype(BF16)
    anb = _pad2d(a_norm, n_pad, n_pad).astype(BF16)
    w1 = _pad2d(params["w1"], f_pad, l1_pad).astype(BF16)
    # Concatenated heads -> 256-lane matmul outputs (fills 2x256 MXU).
    w2 = jnp.concatenate(
        [_pad2d(params["w2mu"], l1_pad, l2_pad),
         _pad2d(params["w2lv"], l1_pad, l2_pad)], axis=1).astype(BF16)
    wd1 = _pad2d(params["wd1"], l2_pad, d1_pad).astype(BF16)
    bd1 = _pad2d(params["bd1"], 1, d1_pad).astype(F32)
    wd2 = _pad2d(params["wd2"], d1_pad, d2_pad).astype(BF16)
    bd2 = _pad2d(params["bd2"], 1, d2_pad).astype(F32)
    wm = jnp.concatenate(
        [_pad2d(params["wm1"], d2_pad, d2_pad),
         _pad2d(params["wm2"], d2_pad, d2_pad)], axis=1).astype(BF16)

    cp = pltpu.CompilerParams(
        dimension_semantics=("parallel", "arbitrary"),
        vmem_limit_bytes=_vmem_limit_bytes())

    def full(shape):
        return pl.BlockSpec(shape, lambda i, k: (0, 0))     # resident block

    def row_tile(cols):
        return pl.BlockSpec((tm, cols), lambda i, k: (i, 0))

    # ---------------- kernel A ----------------------------------------------
    flops_a = 2 * n_pad * n_pad * f_pad + 2 * n_pad * f_pad * l1_pad
    bytes_a = int(anb.size * 2 + n_tiles * xb.size * 2 + w1.size * 2
                  + n_pad * l1_pad * 2)
    h1_b = pl.pallas_call(
        _hop1_kernel,
        grid=(n_tiles, n_tiles),
        in_specs=[pl.BlockSpec((tm, tm), lambda i, k: (i, k)),
                  pl.BlockSpec((tm, f_pad), lambda i, k: (k, 0)),
                  full((f_pad, l1_pad))],
        out_specs=row_tile(l1_pad),
        out_shape=jax.ShapeDtypeStruct((n_pad, l1_pad), BF16),
        scratch_shapes=[pltpu.VMEM((tm, f_pad), F32)],
        compiler_params=cp,
        cost_estimate=pl.CostEstimate(flops=flops_a, transcendentals=0,
                                      bytes_accessed=bytes_a),
    )(anb, xb, w1)

    # ---------------- kernel B ----------------------------------------------
    kernel_b = _make_encdec_kernel(float(std0), bool(for_test), l2_pad, d2_pad)
    b_args = [anb, h1_b]
    b_specs = [pl.BlockSpec((tm, tm), lambda i, k: (i, k)),
               pl.BlockSpec((tm, l1_pad), lambda i, k: (k, 0))]
    if for_test:
        epsb = _pad2d(eps_noise, n_pad, l2_pad).astype(F32)
        b_args.append(epsb)
        b_specs.append(row_tile(l2_pad))
    b_args += [w2, wd1, bd1, wd2, bd2, wm]
    b_specs += [full((l1_pad, 2 * l2_pad)),
                full((l2_pad, d1_pad)), full((1, d1_pad)),
                full((d1_pad, d2_pad)), full((1, d2_pad)),
                full((d2_pad, 2 * d2_pad))]
    flops_b = (2 * n_pad * n_pad * l1_pad
               + 2 * n_pad * l1_pad * 2 * l2_pad
               + 2 * n_pad * l2_pad * d1_pad
               + 2 * n_pad * d1_pad * d2_pad
               + 2 * n_pad * d2_pad * 2 * d2_pad)
    bytes_b = int(anb.size * 2 + n_tiles * h1_b.size * 2
                  + (w2.size + wd1.size + wd2.size + wm.size) * 2
                  + n_pad * (2 * l2_pad * 4 + 2 * d2_pad * 2))
    mu_p, lvs_p, emb1n_b, emb2n_b = pl.pallas_call(
        kernel_b,
        grid=(n_tiles, n_tiles),
        in_specs=b_specs,
        out_specs=(row_tile(l2_pad), row_tile(l2_pad),
                   row_tile(d2_pad), row_tile(d2_pad)),
        out_shape=(jax.ShapeDtypeStruct((n_pad, l2_pad), F32),
                   jax.ShapeDtypeStruct((n_pad, l2_pad), F32),
                   jax.ShapeDtypeStruct((n_pad, d2_pad), BF16),
                   jax.ShapeDtypeStruct((n_pad, d2_pad), BF16)),
        scratch_shapes=[pltpu.VMEM((tm, l1_pad), F32)],
        compiler_params=cp,
        cost_estimate=pl.CostEstimate(flops=flops_b, transcendentals=3 * n_pad,
                                      bytes_accessed=bytes_b),
    )(*b_args)

    # ---------------- kernel C ----------------------------------------------
    with_gan = not for_test
    kernel_c = _make_reconst_kernel(with_gan)
    c_args = [emb1n_b, emb2n_b]
    c_specs = [pl.BlockSpec((tm, d2_pad), lambda i, j: (i, 0)),
               pl.BlockSpec((tm, d2_pad), lambda i, j: (j, 0))]
    c_out_shape = [jax.ShapeDtypeStruct((n_pad, n_pad), BF16)]
    c_out_specs = [pl.BlockSpec((tm, tm), lambda i, j: (i, j))]
    c_scratch = []
    c_scalar = None
    if with_gan:
        # Discriminator GCN folded to matvecs (hoisted out of the kernels):
        #   u = x @ (Wgcn @ Wlin),   c = bgcn @ Wlin   (requires F == D2).
        wv = jnp.dot(params["wgcn"], params["wlin"])            # (D2, 1)
        u = jnp.dot(x, wv)                                      # (N, 1)
        c_scalar = jnp.dot(params["bgcn"], params["wlin"])[0, 0]
        u_row = _pad2d(u.T, 1, n_pad).astype(BF16)              # (1, n_pad)
        adjb = _pad2d(sub_adj, n_pad, n_pad).astype(BF16)       # exact for 0/1
        c_args += [adjb, u_row]
        c_specs += [pl.BlockSpec((tm, tm), lambda i, j: (i, j)),
                    pl.BlockSpec((1, tm), lambda i, j: (0, j))]
        c_out_shape.append(jax.ShapeDtypeStruct((2, n_pad), F32))
        c_out_specs.append(pl.BlockSpec((2, tm), lambda i, j: (0, i)))
        c_scratch = [pltpu.VMEM((1, tm), F32), pltpu.VMEM((1, d2_pad), F32)]
    flops_c = 2 * n_pad * n_pad * d2_pad + (6 * n_pad * n_pad if with_gan else 0)
    bytes_c = int(n_tiles * (emb1n_b.size + emb2n_b.size) * 2
                  + n_pad * n_pad * 2
                  + (n_pad * n_pad * 2 + 10 * n_pad if with_gan else 0))
    outs = pl.pallas_call(
        kernel_c,
        grid=(n_tiles, n_tiles),
        in_specs=c_specs,
        out_specs=tuple(c_out_specs),
        out_shape=tuple(c_out_shape),
        scratch_shapes=c_scratch,
        compiler_params=cp,
        cost_estimate=pl.CostEstimate(flops=flops_c, transcendentals=0,
                                      bytes_accessed=bytes_c),
    )(*c_args)

    mu = mu_p[:N, :L2]
    logvar_sub = lvs_p[:N, :L2]
    if with_gan:
        reconst_p, gan2 = outs
        orig = gan2[0, :N] + c_scalar
        gen = gan2[1, :N] + c_scalar
        gan_pred = jnp.concatenate([orig[:, None], gen[:, None]], axis=0)
        gan_label = jnp.concatenate(
            [jnp.ones((N, 1), F32), jnp.zeros((N, 1), F32)], axis=0)
    else:
        (reconst_p,) = outs
        gan_pred, gan_label = None, None
    # reconst computed/stored bf16 (halves the dominant N^2 HBM writeback);
    # cast back to f32 for downstream loss math.
    reconst_adj = reconst_p[:N, :N].astype(F32)
    return mu, logvar_sub, reconst_adj, gan_pred, gan_label


def make_params(key, feature_dim, layer1_dim, layer2_dim, dec1_dim, dec2_dim):
    ks = jax.random.split(key, 12)
    scale = 0.1

    def w(k, shape):
        return scale * jax.random.normal(k, shape, jnp.float32)

    # Weights stored as [in_dim, out_dim] (transposed vs torch nn.Linear.weight).
    return {
        "w1":   w(ks[0], (feature_dim, layer1_dim)),      # enc1
        "w2mu": w(ks[1], (layer1_dim, layer2_dim)),       # enc2
        "w2lv": w(ks[2], (layer1_dim, layer2_dim)),       # enc3
        "wd1":  w(ks[3], (layer2_dim, dec1_dim)),         # dec1
        "bd1":  w(ks[4], (1, dec1_dim)),
        "wd2":  w(ks[5], (dec1_dim, dec2_dim)),           # dec2
        "bd2":  w(ks[6], (1, dec2_dim)),
        "wm1":  w(ks[7], (dec2_dim, dec2_dim)),           # mapping1 (no bias)
        "wm2":  w(ks[8], (dec2_dim, dec2_dim)),           # mapping2 (no bias)
        "wgcn": w(ks[9], (dec2_dim, dec2_dim)),           # disc_gcn
        "bgcn": w(ks[10], (1, dec2_dim)),
        "wlin": w(ks[11], (dec2_dim, 1)),                 # disc_linear (no bias)
    }


if __name__ == "__main__":
    key = jax.random.PRNGKey(0)
    k_feat, k_adj, k_eps, k_par = jax.random.split(key, 4)

    # Small synthetic graph.  NOTE: the discriminator GCN requires
    # feature_dim == dec2_dim (as in the original model's config).
    N = 8
    feature_dim = 32
    layer1_dim = 32
    layer2_dim = 32
    dec1_dim = 32
    dec2_dim = 32
    std0 = 1.0

    feats = jax.random.normal(k_feat, (N, feature_dim), jnp.float32)

    # Deterministic symmetric 0/1 adjacency (no self-loops) = sub_adj.
    adj_raw = (jax.random.uniform(k_adj, (N, N)) < 0.4).astype(jnp.float32)
    sub_adj = jnp.maximum(adj_raw, adj_raw.T) * (1.0 - jnp.eye(N, dtype=jnp.float32))

    # Row-normalized (A + I): deterministic stand-in for sampled mean aggregation.
    a_hat = sub_adj + jnp.eye(N, dtype=jnp.float32)
    a_norm = a_hat / jnp.sum(a_hat, axis=1, keepdims=True)

    eps_noise = jax.random.normal(k_eps, (N, layer2_dim), jnp.float32)

    params = make_params(k_par, feature_dim, layer1_dim, layer2_dim,
                         dec1_dim, dec2_dim)

    # ---- training mode (discriminator on, no noise) --------------------------
    mu, logvar_sub, reconst_adj, gan_pred, gan_label = ggan_forward(
        feats, a_norm, sub_adj, eps_noise, params, std0=std0, for_test=False)
    jax.block_until_ready((mu, logvar_sub, reconst_adj, gan_pred, gan_label))

    assert mu.shape == (N, layer2_dim)
    assert logvar_sub.shape == (N, layer2_dim)
    assert reconst_adj.shape == (N, N)
    assert gan_pred.shape == (2 * N, 1)
    assert gan_label.shape == (2 * N, 1)
    assert bool(jnp.all(jnp.isfinite(mu)))
    assert bool(jnp.all(jnp.isfinite(logvar_sub)))
    assert bool(jnp.all(jnp.isfinite(reconst_adj)))
    assert bool(jnp.all(jnp.isfinite(gan_pred)))

    # ---- test mode (noise on, discriminator skipped) --------------------------
    mu_t, logvar_sub_t, reconst_t, gp_t, gl_t = ggan_forward(
        feats, a_norm, sub_adj, eps_noise, params, std0=std0, for_test=True)
    jax.block_until_ready((mu_t, logvar_sub_t, reconst_t))

    assert mu_t.shape == (N, layer2_dim)
    assert reconst_t.shape == (N, N)
    assert gp_t is None and gl_t is None
    assert bool(jnp.all(jnp.isfinite(reconst_t)))

    print("KERNEL_OK")
</pallas_src>

<mosaic_0001>
module attributes {stable_mosaic.version = 11 : i64} {
  func.func @_hop1_kernel(%arg0: i32, %arg1: i32, %arg2: memref<8x8xbf16, #tpu.memory_space<vmem>>, %arg3: memref<8x128xbf16, #tpu.memory_space<vmem>>, %arg4: memref<128x128xbf16, #tpu.memory_space<vmem>>, %arg5: memref<8x128xbf16, #tpu.memory_space<vmem>>, %arg6: memref<8x128xf32, #tpu.memory_space<vmem>>) attributes {dimension_semantics = [#tpu.dimension_semantics<parallel>, #tpu.dimension_semantics<arbitrary>], iteration_bounds = array<i64: 1, 1>, scalar_prefetch = 0 : i64, scratch_operands = 1 : i64, tpu.core_type = #tpu.core_type<tc>, window_params = [{transform_indices = @transform_0, window_bounds = array<i64: 8, 8>}, {transform_indices = @transform_1, window_bounds = array<i64: 8, 128>}, {pipeline_mode = #tpu.pipeline_mode<synchronous>, transform_indices = @transform_2, window_bounds = array<i64: 128, 128>}, {transform_indices = @transform_3, window_bounds = array<i64: 8, 128>}]} {
    %c0_i32 = arith.constant 0 : i32
    %0 = arith.cmpi eq, %arg1, %c0_i32 : i32
    %1 = arith.extui %0 : i1 to i32
    %c0_i32_0 = arith.constant 0 : i32
    %2 = arith.cmpi ne, %1, %c0_i32_0 : i32
    scf.if %2 {
      %cst_10 = arith.constant 0.000000e+00 : f32
      %12 = vector.broadcast %cst_10 : f32 to vector<8x128xf32>
      %c0_11 = arith.constant 0 : index
      %c0_12 = arith.constant 0 : index
      %13 = vector.load %arg6[%c0_11, %c0_12] : memref<8x128xf32, #tpu.memory_space<vmem>>, vector<8x128xf32>
      tpu.vector_store %arg6[%c0_11, %c0_12], %12 {strides = array<i32>} : memref<8x128xf32, #tpu.memory_space<vmem>>, vector<8x128xf32>,
    } else {
    }
    %c0 = arith.constant 0 : index
    %c0_1 = arith.constant 0 : index
    %3 = vector.load %arg6[%c0, %c0_1] : memref<8x128xf32, #tpu.memory_space<vmem>>, vector<8x128xf32>
    %c0_2 = arith.constant 0 : index
    %c0_3 = arith.constant 0 : index
    %4 = vector.load %arg2[%c0_2, %c0_3] : memref<8x8xbf16, #tpu.memory_space<vmem>>, vector<8x8xbf16>
    %c0_4 = arith.constant 0 : index
    %c0_5 = arith.constant 0 : index
    %5 = vector.load %arg3[%c0_4, %c0_5] : memref<8x128xbf16, #tpu.memory_space<vmem>>, vector<8x128xbf16>
    %cst = arith.constant dense<0.000000e+00> : vector<8x128xf32>
    %6 = tpu.matmul %4, %5, %cst {dimension_numbers = #tpu.dot_dimension_numbers<[1], [0], [0], [1], [0, 0, 1, 1], [], []>} : vector<8x8xbf16>, vector<8x128xbf16>, vector<8x128xf32> -> vector<8x128xf32>
    %7 = arith.addf %3, %6 : vector<8x128xf32>
    %c0_6 = arith.constant 0 : index
    %c0_7 = arith.constant 0 : index
    %8 = vector.load %arg6[%c0_6, %c0_7] : memref<8x128xf32, #tpu.memory_space<vmem>>, vector<8x128xf32>
    tpu.vector_store %arg6[%c0_6, %c0_7], %7 {strides = array<i32>} : memref<8x128xf32, #tpu.memory_space<vmem>>, vector<8x128xf32>,
    %c0_i32_8 = arith.constant 0 : i32
    %9 = arith.cmpi eq, %arg1, %c0_i32_8 : i32
    %10 = arith.extui %9 : i1 to i32
    %c0_i32_9 = arith.constant 0 : i32
    %11 = arith.cmpi ne, %10, %c0_i32_9 : i32
    scf.if %11 {
      %c0_10 = arith.constant 0 : index
      %c0_11 = arith.constant 0 : index
      %12 = vector.load %arg6[%c0_10, %c0_11] : memref<8x128xf32, #tpu.memory_space<vmem>>, vector<8x128xf32>
      %13 = arith.truncf %12 : vector<8x128xf32> to vector<8x128xbf16>
      %c0_12 = arith.constant 0 : index
      %c0_13 = arith.constant 0 : index
      %14 = vector.load %arg4[%c0_12, %c0_13] : memref<128x128xbf16, #tpu.memory_space<vmem>>, vector<128x128xbf16>
      %cst_14 = arith.constant dense<0.000000e+00> : vector<8x128xf32>
      %15 = tpu.matmul %13, %14, %cst_14 {dimension_numbers = #tpu.dot_dimension_numbers<[1], [0], [0], [1], [0, 0, 1, 1], [], []>} : vector<8x128xbf16>, vector<128x128xbf16>, vector<8x128xf32> -> vector<8x128xf32>
      %cst_15 = arith.constant 0.000000e+00 : f32
      %16 = vector.broadcast %cst_15 : f32 to vector<8x128xf32>
      %17 = arith.maximumf %15, %16 : vector<8x128xf32>
      %18 = arith.truncf %17 : vector<8x128xf32> to vector<8x128xbf16>
      %c0_16 = arith.constant 0 : index
      %c0_17 = arith.constant 0 : index
      %19 = vector.load %arg5[%c0_16, %c0_17] : memref<8x128xbf16, #tpu.memory_space<vmem>>, vector<8x128xbf16>
      tpu.vector_store %arg5[%c0_16, %c0_17], %18 {strides = array<i32>} : memref<8x128xbf16, #tpu.memory_space<vmem>>, vector<8x128xbf16>,
    } else {
    }
    return
  }
  func.func @transform_0(%arg0: i32, %arg1: i32) -> (i32, i32) {
    %c0_i32 = arith.constant 0 : i32
    return %arg0, %arg1 : i32, i32
  }
  func.func @transform_1(%arg0: i32, %arg1: i32) -> (i32, i32) {
    %c0_i32 = arith.constant 0 : i32
    %c0_i32_0 = arith.constant 0 : i32
    return %arg1, %c0_i32 : i32, i32
  }
  func.func @transform_2(%arg0: i32, %arg1: i32) -> (i32, i32) {
    %c0_i32 = arith.constant 0 : i32
    %c0_i32_0 = arith.constant 0 : i32
    %c0_i32_1 = arith.constant 0 : i32
    return %c0_i32, %c0_i32_0 : i32, i32
  }
  func.func @transform_3(%arg0: i32, %arg1: i32) -> (i32, i32) {
    %c0_i32 = arith.constant 0 : i32
    %c0_i32_0 = arith.constant 0 : i32
    return %arg0, %c0_i32 : i32, i32
  }
}

</mosaic_0001>

<llo_original>
// kernel: tpu_custom_call.1
$region0: #{tpu_custom_call.1}
  #allocation0 [shape = 'u32[]', space=smem, size = 0x4, offset = 0x4, fixed_abs, tag = 'smem constant byte address 0x4 - core index']
  #allocation1 [shape = 'u32[144,128]{1,0:T(1,128)}', space=vmem, size = 0x12000, scoped, tag = 'internal scratch']
  #allocation2 [shape = 'f32[8,128]{1,0:T(8,128)}', space=vmem, size = 0x1000, scoped, tag = 'scratch operand']
  %s0 = inlined_call_operand.hbm [shape: bf16[8,8], index: 0, kind: input, shape index: {}]
  %s1 = inlined_call_operand.hbm [shape: bf16[8,128], index: 1, kind: input, shape index: {}]
  %s2 = inlined_call_operand.hbm [shape: bf16[128,128], index: 2, kind: input, shape index: {}]
  %s3 = inlined_call_operand.hbm [shape: bf16[8,128], index: 3, kind: output, shape index: {}]
  %s4 = sld [smem:[#allocation0]]
  $region42: #{tpu_custom_call.1} parent=0
    _
  %s6 = ssub.s32 1, %s4
  %s7 = scalar_select 0, %s6, %s4
  $region1: #{tpu_custom_call.1} parent=0
    #allocation3 [shape = 'u8[2048]{0}', space=vmem, size = 0x800, scoped, tag = 'input window, operand 0, single buffered']
    #allocation4 [shape = 's32[1]{0}', space=sflag, size = 0x4, scoped, tag = 'scoped memory for tpu_custom_call.1']
    #allocation5 [shape = 's32[1]{0}', space=sflag, size = 0x4, scoped, tag = 'scoped memory for tpu_custom_call.1']
    #allocation6 [shape = 'u8[2048]{0}', space=vmem, size = 0x800, scoped, tag = 'input window, operand 1, single buffered']
    #allocation7 [shape = 's32[1]{0}', space=sflag, size = 0x4, scoped, tag = 'scoped memory for tpu_custom_call.1']
    #allocation8 [shape = 'u8[32768]{0}', space=vmem, size = 0x8000, scoped, tag = 'input window, operand 2, single buffered']
    #allocation9 [shape = 'u8[2048]{0}', space=vmem, size = 0x800, scoped, tag = 'output window, operand 0, single buffered']
    %8 = vsyncpa [#allocation4], 0
    %9 = vsyncpa [#allocation7], 0
    %10 = vsyncpa [#allocation5], 0
    // Predicated region
    $region2: #{tpu_custom_call.1} parent=1 // pred_check
      _
    $region3: #{tpu_custom_call.1} parent=1 // pred_check_branch
      %12 = sbr.rel (0) target = $region5
    $region4: #{tpu_custom_call.1} parent=1 // pred_region
      %s14 = ssub.s32 64, 64
      %15 = vsyncadd [#allocation4], %s14
      %s17 = sshll.u32 [#allocation3], 4
      %s18 = int_to_ptr.vmem [resolvable:$true] %s17
      %20 = dma.hbm_to_vmem [thread:$0]  %s0, 64, %s18, [#allocation4]
    $region5: #{tpu_custom_call.1} parent=1 // pred_fallthru
      _
    // Predicated region
    $region6: #{tpu_custom_call.1} parent=1 // pred_check
      _
    $region7: #{tpu_custom_call.1} parent=1 // pred_check_branch
      %22 = sbr.rel (0) target = $region9
    $region8: #{tpu_custom_call.1} parent=1 // pred_region
      %s24 = ssub.s32 64, 64
      %25 = vsyncadd [#allocation7], %s24
      %s27 = sshll.u32 [#allocation6], 4
      %s28 = int_to_ptr.vmem [resolvable:$true] %s27
      %30 = dma.hbm_to_vmem [thread:$0]  %s1, 64, %s28, [#allocation7]
    $region9: #{tpu_custom_call.1} parent=1 // pred_fallthru
      _
    // Predicated region
    $region10: #{tpu_custom_call.1} parent=1 // pred_check
      _
    $region11: #{tpu_custom_call.1} parent=1 // pred_check_branch
      %32 = sbr.rel (0) target = $region13
    $region12: #{tpu_custom_call.1} parent=1 // pred_region
      %s34 = ssub.s32 1024, 1024
      %35 = vsyncadd [#allocation7], %s34
      %s36 = sshll.u32 [#allocation8], 4
      %s37 = int_to_ptr.vmem [resolvable:$true] %s36
      %42 = dma.hbm_to_vmem [thread:$0]  %s2, 1024, %s37, [#allocation7], 64, 64, 4
    $region13: #{tpu_custom_call.1} parent=1 // pred_fallthru
      _
    // Predicated region
    $region14: #{tpu_custom_call.1} parent=1 // pred_check
      _
    $region15: #{tpu_custom_call.1} parent=1 // pred_check_branch
      %44 = sbr.rel (0) target = $region17
    $region16: #{tpu_custom_call.1} parent=1 // pred_region
      %45 = dma.done [#allocation4], 64
    $region17: #{tpu_custom_call.1} parent=1 // pred_fallthru
      _
    // Predicated region
    $region18: #{tpu_custom_call.1} parent=1 // pred_check
      _
    $region19: #{tpu_custom_call.1} parent=1 // pred_check_branch
      %47 = sbr.rel (0) target = $region21
    $region20: #{tpu_custom_call.1} parent=1 // pred_region
      %48 = dma.done [#allocation7], 64
    $region21: #{tpu_custom_call.1} parent=1 // pred_fallthru
      _
    // Predicated region
    $region22: #{tpu_custom_call.1} parent=1 // pred_check
      _
    $region23: #{tpu_custom_call.1} parent=1 // pred_check_branch
      %50 = sbr.rel (0) target = $region25
    $region24: #{tpu_custom_call.1} parent=1 // pred_region
      %51 = dma.done [#allocation7], 1024
    $region25: #{tpu_custom_call.1} parent=1 // pred_fallthru
      _
    %p53 = scmp.eq.s32.totalorder 0, 0
    // Predicated region
    $region26: #{tpu_custom_call.1} parent=1 // pred_check
      %p54 = pneg %p53
    $region27: #{tpu_custom_call.1} parent=1 // pred_check_branch
      %56 = sbr.rel (%p54) target = $region29
    $region28: #{tpu_custom_call.1} parent=1 // pred_region
      %57 = vst [vmem:[#allocation2] sm:$0xff] 0.0
    $region29: #{tpu_custom_call.1} parent=1 // pred_fallthru
      _
    %v58 = vld [vmem:[#allocation2] sm:$0xff]
    %v59 = vld [vmem:[#allocation3] sm:$0xf]
    %v60 = vld [vmem:[#allocation6] sm:$0xf]
    %vm61 = vcmask 64512
    %v63 = vsel %vm61, %v59, 0
    %vm65 = vcmask 1043456
    %v67 = vsel %vm65, %v60, 0
    %69 = vmatprep.subr.bf16.mxu0 0
    %70 = vmatpush1.bf16.msra.mxu0 0
    %71 = vmatprep.subr.bf16.mxu0 0
    %72 = vmatpush1.bf16.msra.mxu0 0
    %73 = vmatprep.subr.bf16.mxu0 0
    %74 = vmatpush1.bf16.msra.mxu0 0
    %75 = vmatprep.subr.bf16.mxu0 0
    %76 = vmatpush1.bf16.msra.mxu0 0
    %77 = vmatprep.subr.bf16.mxu0 0
    %78 = vmatpush1.bf16.msra.mxu0 0
    %79 = vmatprep.subr.bf16.mxu0 0
    %80 = vmatpush1.bf16.msra.mxu0 0
    %81 = vmatprep.subr.bf16.mxu0 0
    %82 = vmatpush1.bf16.msra.mxu0 0
    %83 = vmatprep.subr.bf16.mxu0 0
    %84 = vmatpush1.bf16.msra.mxu0 %v67
    %85 = vmatprep.subr.bf16.mxu0 0
    %86 = vmatpush2.bf16.msra.mxu0 0
    %87 = vmatprep.subr.bf16.mxu0 0
    %88 = vmatpush2.bf16.msra.mxu0 0
    %89 = vmatprep.subr.bf16.mxu0 0
    %90 = vmatpush2.bf16.msra.mxu0 0
    %91 = vmatprep.subr.bf16.mxu0 0
    %92 = vmatpush2.bf16.msra.mxu0 0
    %93 = vmatprep.subr.bf16.mxu0 0
    %94 = vmatpush2.bf16.msra.mxu0 0
    %95 = vmatprep.subr.bf16.mxu0 0
    %96 = vmatpush2.bf16.msra.mxu0 0
    %97 = vmatprep.subr.bf16.mxu0 0
    %98 = vmatpush2.bf16.msra.mxu0 0
    %99 = vmatprep.subr.bf16.mxu0 0
    %100 = vmatpush2.bf16.msra.mxu0 0
    %101 = vmatprep.mubr.bf16.mxu0 0
    %102 = vmatmul.mubr.bf16.gmra.mxu0 %v63
    %v103 = vpop.f32.mrf.mxu0
    %v104 = vadd.f32 0.0, %v103
    %v105 = vpop.f32.mrf.mxu0
    %v106 = vpop.f32.mrf.mxu0
    %v107 = vpop.f32.mrf.mxu0
    %108 = vdwg.mxu0
    %v109 = vadd.f32 %v58, %v104
    %110 = vst [vmem:[#allocation2] sm:$0xff] %v109
    // Predicated region
    $region30: #{tpu_custom_call.1} parent=1 // pred_check
      %p111 = pneg %p53
    $region31: #{tpu_custom_call.1} parent=1 // pred_check_branch
      %113 = sbr.rel (%p111) target = $region33
    $region32: #{tpu_custom_call.1} parent=1 // pred_region
      %v114 = vld [vmem:[#allocation2] sm:$0xff]
      %v115 = vpack.c.bf16 %v114, %v114
      %v116 = vld [vmem:[#allocation8] sm:$0xf]
      %v117 = vld [vmem:[#allocation8 + $0x4] sm:$0xf]
      %v118 = vld [vmem:[#allocation8 + $0x8] sm:$0xf]
      %v119 = vld [vmem:[#allocation8 + $0xc] sm:$0xf]
      %v120 = vld [vmem:[#allocation8 + $0x10] sm:$0xf]
      %v121 = vld [vmem:[#allocation8 + $0x14] sm:$0xf]
      %v122 = vld [vmem:[#allocation8 + $0x18] sm:$0xf]
      %v123 = vld [vmem:[#allocation8 + $0x1c] sm:$0xf]
      %v124 = vld [vmem:[#allocation8 + $0x20] sm:$0xf]
      %v125 = vld [vmem:[#allocation8 + $0x24] sm:$0xf]
      %v126 = vld [vmem:[#allocation8 + $0x28] sm:$0xf]
      %v127 = vld [vmem:[#allocation8 + $0x2c] sm:$0xf]
      %v128 = vld [vmem:[#allocation8 + $0x30] sm:$0xf]
      %v129 = vld [vmem:[#allocation8 + $0x34] sm:$0xf]
      %v130 = vld [vmem:[#allocation8 + $0x38] sm:$0xf]
      %v131 = vld [vmem:[#allocation8 + $0x3c] sm:$0xf]
      %v148 = vunpack.c.l.b16 %v116
      %v149 = vunpack.c.l.b16 %v117
      %v150 = vunpack.c.l.b16 %v118
      %v151 = vunpack.c.l.b16 %v119
      %v152 = vunpack.c.l.b16 %v120
      %v153 = vunpack.c.l.b16 %v121
      %v154 = vunpack.c.l.b16 %v122
      %v155 = vunpack.c.l.b16 %v123
      %v156 = vunpack.c.l.b16 %v124
      %v157 = vunpack.c.l.b16 %v125
      %v158 = vunpack.c.l.b16 %v126
      %v159 = vunpack.c.l.b16 %v127
      %v160 = vunpack.c.l.b16 %v128
      %v161 = vunpack.c.l.b16 %v129
      %v162 = vunpack.c.l.b16 %v130
      %v163 = vunpack.c.l.b16 %v131
      %v164 = vpack.c.b16 %v149, %v148
      %v165 = vpack.c.b16 %v151, %v150
      %v166 = vpack.c.b16 %v153, %v152
      %v167 = vpack.c.b16 %v155, %v154
      %v168 = vpack.c.b16 %v157, %v156
      %v169 = vpack.c.b16 %v159, %v158
      %v170 = vpack.c.b16 %v161, %v160
      %v171 = vpack.c.b16 %v163, %v162
      %180 = vmatprep.subr.bf16.mxu0 0
      %181 = vmatpush1.bf16.msra.mxu0 %v171
      %182 = vmatprep.subr.bf16.mxu0 0
      %183 = vmatpush1.bf16.msra.mxu0 %v170
      %184 = vmatprep.subr.bf16.mxu0 0
      %185 = vmatpush1.bf16.msra.mxu0 %v169
      %186 = vmatprep.subr.bf16.mxu0 0
      %187 = vmatpush1.bf16.msra.mxu0 %v168
      %188 = vmatprep.subr.bf16.mxu0 0
      %189 = vmatpush1.bf16.msra.mxu0 %v167
      %190 = vmatprep.subr.bf16.mxu0 0
      %191 = vmatpush1.bf16.msra.mxu0 %v166
      %192 = vmatprep.subr.bf16.mxu0 0
      %193 = vmatpush1.bf16.msra.mxu0 %v165
      %194 = vmatprep.subr.bf16.mxu0 0
      %195 = vmatpush1.bf16.msra.mxu0 %v164
      %196 = vmatprep.subr.bf16.mxu0 0
      %197 = vmatpush2.bf16.msra.mxu0 0
      %198 = vmatprep.subr.bf16.mxu0 0
      %199 = vmatpush2.bf16.msra.mxu0 0
      %200 = vmatprep.subr.bf16.mxu0 0
      %201 = vmatpush2.bf16.msra.mxu0 0
      %202 = vmatprep.subr.bf16.mxu0 0
      %203 = vmatpush2.bf16.msra.mxu0 0
      %204 = vmatprep.subr.bf16.mxu0 0
      %205 = vmatpush2.bf16.msra.mxu0 0
      %206 = vmatprep.subr.bf16.mxu0 0
      %207 = vmatpush2.bf16.msra.mxu0 0
      %208 = vmatprep.subr.bf16.mxu0 0
      %209 = vmatpush2.bf16.msra.mxu0 0
      %210 = vmatprep.subr.bf16.mxu0 0
      %211 = vmatpush2.bf16.msra.mxu0 0
      %212 = vmatprep.mubr.bf16.mxu0 0
      %213 = vmatmul.mubr.bf16.gmra.mxu0 %v115
      %v214 = vpop.f32.mrf.mxu0
      %v215 = vadd.f32 0.0, %v214
      %v216 = vpop.f32.mrf.mxu0
      %v217 = vpop.f32.mrf.mxu0
      %v218 = vpop.f32.mrf.mxu0
      %219 = vdwg.mxu0
      %v220 = vmax.f32 %v215, 0.0
      %v221 = vpack.c.bf16 %v220, %v220
      %222 = vst [vmem:[#allocation9] sm:$0xf] %v221
    $region33: #{tpu_custom_call.1} parent=1 // pred_fallthru
      _
    // Predicated region
    $region34: #{tpu_custom_call.1} parent=1 // pred_check
      _
    $region35: #{tpu_custom_call.1} parent=1 // pred_check_branch
      %224 = sbr.rel (0) target = $region37
    $region36: #{tpu_custom_call.1} parent=1 // pred_region
      %s226 = ssub.s32 64, 64
      %227 = vsyncadd [#allocation5], %s226
      %s229 = sshll.u32 [#allocation9], 4
      %s230 = int_to_ptr.vmem [resolvable:$true] %s229
      %232 = dma.vmem_to_hbm [thread:$0]  %s230, 64, %s3, [#allocation5]
    $region37: #{tpu_custom_call.1} parent=1 // pred_fallthru
      _
    // Predicated region
    $region38: #{tpu_custom_call.1} parent=1 // pred_check
      _
    $region39: #{tpu_custom_call.1} parent=1 // pred_check_branch
      %234 = sbr.rel (0) target = $region41
    $region40: #{tpu_custom_call.1} parent=1 // pred_region
      %235 = dma.done [#allocation5], 64
    $region41: #{tpu_custom_call.1} parent=1 // pred_fallthru
      _
    %236 = vsyncpa [#allocation4], 1
    %237 = vsyncpa [#allocation7], 1
    %238 = vsyncpa [#allocation5], 1

</llo_original>
